<compile_context>
chip_gen: v5e
topology: v5e:2x2
jax: 0.10.0
libtpu: 0.0.40
codegen_flags: <defaults>
</compile_context>

<pallas_src>
import functools

import jax
import jax.numpy as jnp
from jax.experimental import pallas as pl
from jax.experimental.pallas import tpu as pltpu


def _round_up(x, m):
    return (x + m - 1) // m * m


def rnd_kernel(obs_ref, w1_ref, b1_ref, w2_ref, b2_ref, out_ref, *, out_dim):
    """One batch tile of the fused RND prediction error.

    obs_ref : (TILE_B, D_pad)     bf16
    w1_ref  : (D_pad, H2_pad)     bf16   [W1_random | W1_distill]
    b1_ref  : (1, H2_pad)         f32    [b1_random | b1_distill]
    w2_ref  : (H2_pad, O_pad)     bf16   [[-W2_random], [W2_distill]]
    b2_ref  : (1, O_pad)          f32    b2_distill - b2_random
    out_ref : (1, TILE_B)         f32    per-row mean squared prediction error
    """
    obs = obs_ref[...]                                           # bf16 tile

    # Layer 1 of BOTH nets in one MXU matmul, f32 accumulation.
    h = jnp.dot(obs, w1_ref[...], preferred_element_type=jnp.float32)
    h = jnp.maximum(h + b1_ref[...], 0.0)                        # (TILE_B, H2_pad) f32

    # Layer 2 directly produces diff = distilling(obs) - random(obs).
    diff = jnp.dot(h.astype(w2_ref.dtype), w2_ref[...],
                   preferred_element_type=jnp.float32) + b2_ref[...]   # (TILE_B, O_pad)

    # Mean of squares over the TRUE out_dim (padded lanes of diff are exactly 0).
    sq = diff * diff
    # Cheap XLU transpose so the per-row reduction lands lane-major; the
    # resulting (1, TILE_B) row is written with wide unmasked stores.
    err = jnp.sum(sq.T, axis=0, keepdims=True) * (1.0 / out_dim)       # (1, TILE_B)
    out_ref[...] = err


def prepare_rnd_params(params_random, params_distill):
    """Fuse + pad + cast the two MLPs' parameters (done once; random net is frozen)."""
    w1r, b1r, w2r, b2r = params_random
    w1d, b1d, w2d, b2d = params_distill
    D, H = w1r.shape
    O = w2r.shape[1]

    # Layer-1 fusion: one (D, 2H) matmul computes both hidden activations.
    w1 = jnp.concatenate([w1r, w1d], axis=1)            # (D, 2H)
    b1 = jnp.concatenate([b1r, b1d], axis=1)            # (1, 2H)
    # Layer-2 fusion: [hr | hd] @ [[-W2r],[W2d]] + (b2d - b2r) = td - tr.
    w2 = jnp.concatenate([-w2r, w2d], axis=0)           # (2H, O)
    b2 = b2d - b2r                                      # (1, O)

    d_pad = _round_up(D, 128)
    h2_pad = _round_up(2 * H, 128)
    o_pad = _round_up(O, 128)

    # Zero-pad to MXU/lane-friendly shapes (zeros keep the math exact).
    w1p = jnp.zeros((d_pad, h2_pad), jnp.float32).at[:D, :2 * H].set(w1)
    b1p = jnp.zeros((1, h2_pad), jnp.float32).at[:, :2 * H].set(b1)
    w2p = jnp.zeros((h2_pad, o_pad), jnp.float32).at[:2 * H, :O].set(w2)
    b2p = jnp.zeros((1, o_pad), jnp.float32).at[:, :O].set(b2)

    fused = (w1p.astype(jnp.bfloat16), b1p, w2p.astype(jnp.bfloat16), b2p)
    dims = dict(d=D, o=O, d_pad=d_pad, h2_pad=h2_pad, o_pad=o_pad)
    return fused, dims


def rnd_forward(obs, fused_params, dims, *, tile_b=256):
    """Pallas-backed RND.forward.  obs: (B, D) f32 -> (B,) f32 pred_error."""
    w1, b1, w2, b2 = fused_params
    D, O = dims["d"], dims["o"]
    d_pad, h2_pad, o_pad = dims["d_pad"], dims["h2_pad"], dims["o_pad"]

    B = obs.shape[0]
    # Don't over-pad small batches: shrink the tile to the 128-rounded batch.
    tile_b = max(128, min(tile_b, _round_up(B, 128)))
    b_pad = _round_up(max(B, tile_b), tile_b)
    num_tiles = b_pad // tile_b

    # Pad batch to a tile multiple + feature dim to 128; cast MXU input to bf16.
    obs_p = jnp.zeros((b_pad, d_pad), jnp.bfloat16)
    obs_p = obs_p.at[:B, :D].set(obs.astype(jnp.bfloat16))

    # VMEM budget: double-buffered obs/out tiles + resident fused weights + temps.
    est = (2 * tile_b * d_pad * 2 + 2 * tile_b * 4
           + (d_pad * h2_pad + h2_pad * o_pad) * 2 + (h2_pad + o_pad) * 4
           + tile_b * (h2_pad + 2 * o_pad + tile_b) * 4)
    vmem_limit = int(min(max(2 * est, 16 << 20), 48 << 20))   # stays under v7x's 64 MiB VMEM

    flops = 2 * b_pad * (d_pad * h2_pad + h2_pad * o_pad)
    bytes_accessed = (obs_p.size * 2 + b_pad * 4
                      + (w1.size + w2.size) * 2 + (b1.size + b2.size) * 4)

    out = pl.pallas_call(
        functools.partial(rnd_kernel, out_dim=O),
        out_shape=jax.ShapeDtypeStruct((1, b_pad), jnp.float32),
        grid=(num_tiles,),
        in_specs=[
            pl.BlockSpec((tile_b, d_pad), lambda i: (i, 0)),     # obs tile (double-buffered)
            pl.BlockSpec((d_pad, h2_pad), lambda i: (0, 0)),     # fused W1 (VMEM-resident)
            pl.BlockSpec((1, h2_pad), lambda i: (0, 0)),         # fused b1
            pl.BlockSpec((h2_pad, o_pad), lambda i: (0, 0)),     # fused W2
            pl.BlockSpec((1, o_pad), lambda i: (0, 0)),          # fused b2
        ],
        out_specs=pl.BlockSpec((1, tile_b), lambda i: (0, i)),   # lane-dense row
        compiler_params=pltpu.CompilerParams(
            dimension_semantics=("parallel",),
            vmem_limit_bytes=vmem_limit,
        ),
        cost_estimate=pl.CostEstimate(
            flops=int(flops),
            transcendentals=0,
            bytes_accessed=int(bytes_accessed)),
    )(obs_p, w1, b1, w2, b2)

    return out.reshape(-1)[:B]


def _init_mlp(key, d_in, d_hidden, d_out):
    """Deterministic init mimicking torch.nn.Linear default (uniform +/- 1/sqrt(fan_in))."""
    k1, k2, k3, k4 = jax.random.split(key, 4)
    lim1 = 1.0 / jnp.sqrt(d_in)
    lim2 = 1.0 / jnp.sqrt(d_hidden)
    w1 = jax.random.uniform(k1, (d_in, d_hidden), jnp.float32, -lim1, lim1)
    b1 = jax.random.uniform(k2, (1, d_hidden), jnp.float32, -lim1, lim1)
    w2 = jax.random.uniform(k3, (d_hidden, d_out), jnp.float32, -lim2, lim2)
    b2 = jax.random.uniform(k4, (1, d_out), jnp.float32, -lim2, lim2)
    return w1, b1, w2, b2


def _reference(obs, pr, pd):
    """Pure-JAX f32 reference of RND.forward (unfused, unpadded)."""
    w1r, b1r, w2r, b2r = pr
    w1d, b1d, w2d, b2d = pd
    tr = jnp.maximum(obs @ w1r + b1r, 0.0) @ w2r + b2r
    td = jnp.maximum(obs @ w1d + b1d, 0.0) @ w2d + b2d
    return jnp.mean((td - tr) ** 2, axis=-1)


if __name__ == "__main__":
    # Small-but-representative shapes: B is not a multiple of the tile to
    # exercise the batch-padding path; feature dims are the typical small RND MLP.
    B, D, H, O = 200, 32, 64, 32

    key = jax.random.PRNGKey(0)
    k_obs, k_rand, k_dist = jax.random.split(key, 3)

    obs = jax.random.normal(k_obs, (B, D), jnp.float32)
    params_random = _init_mlp(k_rand, D, H, O)
    params_distill = _init_mlp(k_dist, D, H, O)

    fused, dims = prepare_rnd_params(params_random, params_distill)
    pred_error = rnd_forward(obs, fused, dims, tile_b=256)
    pred_error = jax.block_until_ready(pred_error)

    ref = _reference(obs, params_random, params_distill)
    assert pred_error.shape == (B,)
    # bf16 MXU inputs -> loose-but-safe tolerance vs the f32 reference.
    assert jnp.allclose(pred_error, ref, rtol=5e-2, atol=1e-3), (
        "mismatch vs reference: max abs diff "
        f"{float(jnp.max(jnp.abs(pred_error - ref)))}")

    print("KERNEL_OK")
</pallas_src>

<mosaic_0001>
module attributes {stable_mosaic.version = 11 : i64} {
  func.func @rnd_kernel(%arg0: i32, %arg1: memref<256x128xbf16, #tpu.memory_space<vmem>>, %arg2: memref<128x128xbf16, #tpu.memory_space<vmem>>, %arg3: memref<1x128xf32, #tpu.memory_space<vmem>>, %arg4: memref<128x128xbf16, #tpu.memory_space<vmem>>, %arg5: memref<1x128xf32, #tpu.memory_space<vmem>>, %arg6: memref<1x256xf32, #tpu.memory_space<vmem>>) attributes {dimension_semantics = [#tpu.dimension_semantics<parallel>], iteration_bounds = array<i64: 1>, scalar_prefetch = 0 : i64, scratch_operands = 0 : i64, tpu.core_type = #tpu.core_type<tc>, window_params = [{transform_indices = @transform_0, window_bounds = array<i64: 256, 128>}, {pipeline_mode = #tpu.pipeline_mode<synchronous>, transform_indices = @transform_1, window_bounds = array<i64: 128, 128>}, {pipeline_mode = #tpu.pipeline_mode<synchronous>, transform_indices = @transform_2, window_bounds = array<i64: 1, 128>}, {pipeline_mode = #tpu.pipeline_mode<synchronous>, transform_indices = @transform_3, window_bounds = array<i64: 128, 128>}, {pipeline_mode = #tpu.pipeline_mode<synchronous>, transform_indices = @transform_4, window_bounds = array<i64: 1, 128>}, {transform_indices = @transform_5, window_bounds = array<i64: 1, 256>}]} {
    %c0 = arith.constant 0 : index
    %c0_0 = arith.constant 0 : index
    %0 = vector.load %arg1[%c0, %c0_0] : memref<256x128xbf16, #tpu.memory_space<vmem>>, vector<256x128xbf16>
    %c0_1 = arith.constant 0 : index
    %c0_2 = arith.constant 0 : index
    %1 = vector.load %arg2[%c0_1, %c0_2] : memref<128x128xbf16, #tpu.memory_space<vmem>>, vector<128x128xbf16>
    %cst = arith.constant dense<0.000000e+00> : vector<256x128xf32>
    %2 = tpu.matmul %0, %1, %cst {dimension_numbers = #tpu.dot_dimension_numbers<[1], [0], [0], [1], [0, 0, 1, 1], [], []>} : vector<256x128xbf16>, vector<128x128xbf16>, vector<256x128xf32> -> vector<256x128xf32>
    %c0_3 = arith.constant 0 : index
    %c0_4 = arith.constant 0 : index
    %3 = vector.load %arg3[%c0_3, %c0_4] : memref<1x128xf32, #tpu.memory_space<vmem>>, vector<1x128xf32>
    %4 = vector.broadcast %3 : vector<1x128xf32> to vector<256x128xf32>
    %5 = arith.addf %2, %4 : vector<256x128xf32>
    %cst_5 = arith.constant 0.000000e+00 : f32
    %6 = vector.broadcast %cst_5 : f32 to vector<256x128xf32>
    %7 = arith.maximumf %5, %6 : vector<256x128xf32>
    %8 = arith.truncf %7 : vector<256x128xf32> to vector<256x128xbf16>
    %c0_6 = arith.constant 0 : index
    %c0_7 = arith.constant 0 : index
    %9 = vector.load %arg4[%c0_6, %c0_7] : memref<128x128xbf16, #tpu.memory_space<vmem>>, vector<128x128xbf16>
    %cst_8 = arith.constant dense<0.000000e+00> : vector<256x128xf32>
    %10 = tpu.matmul %8, %9, %cst_8 {dimension_numbers = #tpu.dot_dimension_numbers<[1], [0], [0], [1], [0, 0, 1, 1], [], []>} : vector<256x128xbf16>, vector<128x128xbf16>, vector<256x128xf32> -> vector<256x128xf32>
    %c0_9 = arith.constant 0 : index
    %c0_10 = arith.constant 0 : index
    %11 = vector.load %arg5[%c0_9, %c0_10] : memref<1x128xf32, #tpu.memory_space<vmem>>, vector<1x128xf32>
    %12 = vector.broadcast %11 : vector<1x128xf32> to vector<256x128xf32>
    %13 = arith.addf %10, %12 : vector<256x128xf32>
    %14 = arith.mulf %13, %13 : vector<256x128xf32>
    %15 = tpu.transpose %14, [1, 0] : vector<256x128xf32> -> vector<128x256xf32>
    %cst_11 = arith.constant dense<0.000000e+00> : vector<256xf32>
    %16 = vector.multi_reduction <add>, %15, %cst_11 [0] : vector<128x256xf32> to vector<256xf32>
    %17 = vector.shape_cast %16 : vector<256xf32> to vector<1x256xf32>
    %cst_12 = arith.constant 3.125000e-02 : f32
    %18 = vector.broadcast %cst_12 : f32 to vector<1x256xf32>
    %19 = arith.mulf %17, %18 : vector<1x256xf32>
    %c0_13 = arith.constant 0 : index
    %c0_14 = arith.constant 0 : index
    %20 = vector.load %arg6[%c0_13, %c0_14] : memref<1x256xf32, #tpu.memory_space<vmem>>, vector<1x256xf32>
    tpu.vector_store %arg6[%c0_13, %c0_14], %19 {strides = array<i32>} : memref<1x256xf32, #tpu.memory_space<vmem>>, vector<1x256xf32>,
    return
  }
  func.func @transform_0(%arg0: i32) -> (i32, i32) {
    %c0_i32 = arith.constant 0 : i32
    %c0_i32_0 = arith.constant 0 : i32
    return %arg0, %c0_i32 : i32, i32
  }
  func.func @transform_1(%arg0: i32) -> (i32, i32) {
    %c0_i32 = arith.constant 0 : i32
    %c0_i32_0 = arith.constant 0 : i32
    %c0_i32_1 = arith.constant 0 : i32
    return %c0_i32, %c0_i32_0 : i32, i32
  }
  func.func @transform_2(%arg0: i32) -> (i32, i32) {
    %c0_i32 = arith.constant 0 : i32
    %c0_i32_0 = arith.constant 0 : i32
    %c0_i32_1 = arith.constant 0 : i32
    return %c0_i32, %c0_i32_0 : i32, i32
  }
  func.func @transform_3(%arg0: i32) -> (i32, i32) {
    %c0_i32 = arith.constant 0 : i32
    %c0_i32_0 = arith.constant 0 : i32
    %c0_i32_1 = arith.constant 0 : i32
    return %c0_i32, %c0_i32_0 : i32, i32
  }
  func.func @transform_4(%arg0: i32) -> (i32, i32) {
    %c0_i32 = arith.constant 0 : i32
    %c0_i32_0 = arith.constant 0 : i32
    %c0_i32_1 = arith.constant 0 : i32
    return %c0_i32, %c0_i32_0 : i32, i32
  }
  func.func @transform_5(%arg0: i32) -> (i32, i32) {
    %c0_i32 = arith.constant 0 : i32
    %c0_i32_0 = arith.constant 0 : i32
    return %c0_i32, %arg0 : i32, i32
  }
}

</mosaic_0001>

<llo_original>
// kernel: tpu_custom_call.1
$region0: #{tpu_custom_call.1}
  #allocation0 [shape = 'u32[]', space=smem, size = 0x4, offset = 0x4, fixed_abs, tag = 'smem constant byte address 0x4 - core index']
  #allocation1 [shape = 'u32[72,128]{1,0:T(1,128)}', space=vmem, size = 0x9000, scoped, tag = 'internal scratch']
  %s0 = inlined_call_operand.hbm [shape: bf16[256,128], index: 0, kind: input, shape index: {}]
  %s1 = inlined_call_operand.hbm [shape: bf16[128,128], index: 1, kind: input, shape index: {}]
  %s2 = inlined_call_operand.vmem [shape: f32[1,128], index: 2, kind: input, shape index: {}]
  %s3 = inlined_call_operand.hbm [shape: bf16[128,128], index: 3, kind: input, shape index: {}]
  %s4 = inlined_call_operand.vmem [shape: f32[1,128], index: 4, kind: input, shape index: {}]
  %s5 = inlined_call_operand.hbm [shape: f32[1,256], index: 5, kind: output, shape index: {}]
  %s6 = sld [smem:[#allocation0]]
  $region42: #{tpu_custom_call.1} parent=0
    _
  %s8 = ssub.s32 1, %s6
  %s9 = scalar_select 0, %s8, %s6
  $region1: #{tpu_custom_call.1} parent=0
    #allocation2 [shape = 'u8[65536]{0}', space=vmem, size = 0x10000, scoped, tag = 'input window, operand 0, single buffered']
    #allocation3 [shape = 's32[1]{0}', space=sflag, size = 0x4, scoped, tag = 'scoped memory for tpu_custom_call.1']
    #allocation4 [shape = 's32[1]{0}', space=sflag, size = 0x4, scoped, tag = 'scoped memory for tpu_custom_call.1']
    #allocation5 [shape = 'u8[32768]{0}', space=vmem, size = 0x8000, scoped, tag = 'input window, operand 1, single buffered']
    #allocation6 [shape = 's32[1]{0}', space=sflag, size = 0x4, scoped, tag = 'scoped memory for tpu_custom_call.1']
    #allocation7 [shape = 'u8[32768]{0}', space=vmem, size = 0x8000, scoped, tag = 'input window, operand 3, single buffered']
    #allocation8 [shape = 'u8[1024]{0}', space=vmem, size = 0x400, scoped, tag = 'output window, operand 0, single buffered']
    %10 = vsyncpa [#allocation3], 0
    %11 = vsyncpa [#allocation6], 0
    %12 = vsyncpa [#allocation4], 0
    // Predicated region
    $region2: #{tpu_custom_call.1} parent=1 // pred_check
      _
    $region3: #{tpu_custom_call.1} parent=1 // pred_check_branch
      %14 = sbr.rel (0) target = $region5
    $region4: #{tpu_custom_call.1} parent=1 // pred_region
      %16 = vsyncadd [#allocation3], 0
      %s17 = sshll.u32 %s0, 4
      %s18 = int_to_ptr.hbm [resolvable:$true] %s17
      %s19 = sshll.u32 [#allocation2], 4
      %s20 = int_to_ptr.vmem [resolvable:$true] %s19
      %25 = dma.hbm_to_vmem [thread:$0]  %s18, 2048, %s20, [#allocation3], 64, 64, 4
    $region5: #{tpu_custom_call.1} parent=1 // pred_fallthru
      _
    // Predicated region
    $region6: #{tpu_custom_call.1} parent=1 // pred_check
      _
    $region7: #{tpu_custom_call.1} parent=1 // pred_check_branch
      %27 = sbr.rel (0) target = $region9
    $region8: #{tpu_custom_call.1} parent=1 // pred_region
      %29 = vsyncadd [#allocation6], 0
      %s30 = sshll.u32 %s1, 4
      %s31 = int_to_ptr.hbm [resolvable:$true] %s30
      %s32 = sshll.u32 [#allocation5], 4
      %s33 = int_to_ptr.vmem [resolvable:$true] %s32
      %38 = dma.hbm_to_vmem [thread:$0]  %s31, 1024, %s33, [#allocation6], 64, 64, 4
    $region9: #{tpu_custom_call.1} parent=1 // pred_fallthru
      _
    // Predicated region
    $region10: #{tpu_custom_call.1} parent=1 // pred_check
      _
    $region11: #{tpu_custom_call.1} parent=1 // pred_check_branch
      %40 = sbr.rel (0) target = $region13
    $region12: #{tpu_custom_call.1} parent=1 // pred_region
      _
    $region13: #{tpu_custom_call.1} parent=1 // pred_fallthru
      _
    // Predicated region
    $region14: #{tpu_custom_call.1} parent=1 // pred_check
      _
    $region15: #{tpu_custom_call.1} parent=1 // pred_check_branch
      %42 = sbr.rel (0) target = $region17
    $region16: #{tpu_custom_call.1} parent=1 // pred_region
      %44 = vsyncadd [#allocation6], 0
      %s45 = sshll.u32 %s3, 4
      %s46 = int_to_ptr.hbm [resolvable:$true] %s45
      %s47 = sshll.u32 [#allocation7], 4
      %s48 = int_to_ptr.vmem [resolvable:$true] %s47
      %53 = dma.hbm_to_vmem [thread:$0]  %s46, 1024, %s48, [#allocation6], 64, 64, 4
    $region17: #{tpu_custom_call.1} parent=1 // pred_fallthru
      _
    // Predicated region
    $region18: #{tpu_custom_call.1} parent=1 // pred_check
      _
    $region19: #{tpu_custom_call.1} parent=1 // pred_check_branch
      %55 = sbr.rel (0) target = $region21
    $region20: #{tpu_custom_call.1} parent=1 // pred_region
      _
    $region21: #{tpu_custom_call.1} parent=1 // pred_fallthru
      _
    // Predicated region
    $region22: #{tpu_custom_call.1} parent=1 // pred_check
      _
    $region23: #{tpu_custom_call.1} parent=1 // pred_check_branch
      %57 = sbr.rel (0) target = $region25
    $region24: #{tpu_custom_call.1} parent=1 // pred_region
      %59 = dma.done [#allocation3], 2048
    $region25: #{tpu_custom_call.1} parent=1 // pred_fallthru
      _
    // Predicated region
    $region26: #{tpu_custom_call.1} parent=1 // pred_check
      _
    $region27: #{tpu_custom_call.1} parent=1 // pred_check_branch
      %61 = sbr.rel (0) target = $region29
    $region28: #{tpu_custom_call.1} parent=1 // pred_region
      %63 = dma.done [#allocation6], 1024
    $region29: #{tpu_custom_call.1} parent=1 // pred_fallthru
      _
    // Predicated region
    $region30: #{tpu_custom_call.1} parent=1 // pred_check
      _
    $region31: #{tpu_custom_call.1} parent=1 // pred_check_branch
      %65 = sbr.rel (0) target = $region33
    $region32: #{tpu_custom_call.1} parent=1 // pred_region
      %67 = dma.done [#allocation6], 1024
    $region33: #{tpu_custom_call.1} parent=1 // pred_fallthru
      _
    %v68 = vld [vmem:[#allocation2] sm:$0xf]
    %v69 = vld [vmem:[#allocation2 + $0x4] sm:$0xf]
    %v70 = vld [vmem:[#allocation2 + $0x8] sm:$0xf]
    %v71 = vld [vmem:[#allocation2 + $0xc] sm:$0xf]
    %v72 = vld [vmem:[#allocation2 + $0x10] sm:$0xf]
    %v73 = vld [vmem:[#allocation2 + $0x14] sm:$0xf]
    %v74 = vld [vmem:[#allocation2 + $0x18] sm:$0xf]
    %v75 = vld [vmem:[#allocation2 + $0x1c] sm:$0xf]
    %v76 = vld [vmem:[#allocation2 + $0x20] sm:$0xf]
    %v77 = vld [vmem:[#allocation2 + $0x24] sm:$0xf]
    %v78 = vld [vmem:[#allocation2 + $0x28] sm:$0xf]
    %v79 = vld [vmem:[#allocation2 + $0x2c] sm:$0xf]
    %v80 = vld [vmem:[#allocation2 + $0x30] sm:$0xf]
    %v81 = vld [vmem:[#allocation2 + $0x34] sm:$0xf]
    %v82 = vld [vmem:[#allocation2 + $0x38] sm:$0xf]
    %v83 = vld [vmem:[#allocation2 + $0x3c] sm:$0xf]
    %v84 = vld [vmem:[#allocation2 + $0x40] sm:$0xf]
    %v85 = vld [vmem:[#allocation2 + $0x44] sm:$0xf]
    %v86 = vld [vmem:[#allocation2 + $0x48] sm:$0xf]
    %v87 = vld [vmem:[#allocation2 + $0x4c] sm:$0xf]
    %v88 = vld [vmem:[#allocation2 + $0x50] sm:$0xf]
    %v89 = vld [vmem:[#allocation2 + $0x54] sm:$0xf]
    %v90 = vld [vmem:[#allocation2 + $0x58] sm:$0xf]
    %v91 = vld [vmem:[#allocation2 + $0x5c] sm:$0xf]
    %v92 = vld [vmem:[#allocation2 + $0x60] sm:$0xf]
    %v93 = vld [vmem:[#allocation2 + $0x64] sm:$0xf]
    %v94 = vld [vmem:[#allocation2 + $0x68] sm:$0xf]
    %v95 = vld [vmem:[#allocation2 + $0x6c] sm:$0xf]
    %v96 = vld [vmem:[#allocation2 + $0x70] sm:$0xf]
    %v97 = vld [vmem:[#allocation2 + $0x74] sm:$0xf]
    %v98 = vld [vmem:[#allocation2 + $0x78] sm:$0xf]
    %v99 = vld [vmem:[#allocation2 + $0x7c] sm:$0xf]
    %v100 = vld [vmem:[#allocation5] sm:$0xf]
    %v101 = vld [vmem:[#allocation5 + $0x4] sm:$0xf]
    %v102 = vld [vmem:[#allocation5 + $0x8] sm:$0xf]
    %v103 = vld [vmem:[#allocation5 + $0xc] sm:$0xf]
    %v104 = vld [vmem:[#allocation5 + $0x10] sm:$0xf]
    %v105 = vld [vmem:[#allocation5 + $0x14] sm:$0xf]
    %v106 = vld [vmem:[#allocation5 + $0x18] sm:$0xf]
    %v107 = vld [vmem:[#allocation5 + $0x1c] sm:$0xf]
    %v108 = vld [vmem:[#allocation5 + $0x20] sm:$0xf]
    %v109 = vld [vmem:[#allocation5 + $0x24] sm:$0xf]
    %v110 = vld [vmem:[#allocation5 + $0x28] sm:$0xf]
    %v111 = vld [vmem:[#allocation5 + $0x2c] sm:$0xf]
    %v112 = vld [vmem:[#allocation5 + $0x30] sm:$0xf]
    %v113 = vld [vmem:[#allocation5 + $0x34] sm:$0xf]
    %v114 = vld [vmem:[#allocation5 + $0x38] sm:$0xf]
    %v115 = vld [vmem:[#allocation5 + $0x3c] sm:$0xf]
    %v116 = vld [vmem:[%s2] sm:$0x1]
    %v118 = vperm.slane %v116, 0
    %v152 = vunpack.c.l.b16 %v68
    %v153 = vunpack.c.l.b16 %v69
    %v154 = vunpack.c.l.b16 %v70
    %v155 = vunpack.c.l.b16 %v71
    %v156 = vunpack.c.l.b16 %v72
    %v157 = vunpack.c.l.b16 %v73
    %v158 = vunpack.c.l.b16 %v74
    %v159 = vunpack.c.l.b16 %v75
    %v160 = vunpack.c.l.b16 %v76
    %v161 = vunpack.c.l.b16 %v77
    %v162 = vunpack.c.l.b16 %v78
    %v163 = vunpack.c.l.b16 %v79
    %v164 = vunpack.c.l.b16 %v80
    %v165 = vunpack.c.l.b16 %v81
    %v166 = vunpack.c.l.b16 %v82
    %v167 = vunpack.c.l.b16 %v83
    %v168 = vunpack.c.l.b16 %v84
    %v169 = vunpack.c.l.b16 %v85
    %v170 = vunpack.c.l.b16 %v86
    %v171 = vunpack.c.l.b16 %v87
    %v172 = vunpack.c.l.b16 %v88
    %v173 = vunpack.c.l.b16 %v89
    %v174 = vunpack.c.l.b16 %v90
    %v175 = vunpack.c.l.b16 %v91
    %v176 = vunpack.c.l.b16 %v92
    %v177 = vunpack.c.l.b16 %v93
    %v178 = vunpack.c.l.b16 %v94
    %v179 = vunpack.c.l.b16 %v95
    %v180 = vunpack.c.l.b16 %v96
    %v181 = vunpack.c.l.b16 %v97
    %v182 = vunpack.c.l.b16 %v98
    %v183 = vunpack.c.l.b16 %v99
    %v184 = vpack.c.b16 %v153, %v152
    %v185 = vpack.c.b16 %v155, %v154
    %v186 = vpack.c.b16 %v157, %v156
    %v187 = vpack.c.b16 %v159, %v158
    %v188 = vpack.c.b16 %v161, %v160
    %v189 = vpack.c.b16 %v163, %v162
    %v190 = vpack.c.b16 %v165, %v164
    %v191 = vpack.c.b16 %v167, %v166
    %v192 = vpack.c.b16 %v169, %v168
    %v193 = vpack.c.b16 %v171, %v170
    %v194 = vpack.c.b16 %v173, %v172
    %v195 = vpack.c.b16 %v175, %v174
    %v196 = vpack.c.b16 %v177, %v176
    %v197 = vpack.c.b16 %v179, %v178
    %v198 = vpack.c.b16 %v181, %v180
    %v199 = vpack.c.b16 %v183, %v182
    %v232 = vunpack.c.l.b16 %v100
    %v233 = vunpack.c.l.b16 %v101
    %v234 = vunpack.c.l.b16 %v102
    %v235 = vunpack.c.l.b16 %v103
    %v236 = vunpack.c.l.b16 %v104
    %v237 = vunpack.c.l.b16 %v105
    %v238 = vunpack.c.l.b16 %v106
    %v239 = vunpack.c.l.b16 %v107
    %v240 = vunpack.c.l.b16 %v108
    %v241 = vunpack.c.l.b16 %v109
    %v242 = vunpack.c.l.b16 %v110
    %v243 = vunpack.c.l.b16 %v111
    %v244 = vunpack.c.l.b16 %v112
    %v245 = vunpack.c.l.b16 %v113
    %v246 = vunpack.c.l.b16 %v114
    %v247 = vunpack.c.l.b16 %v115
    %v248 = vpack.c.b16 %v233, %v232
    %v249 = vpack.c.b16 %v235, %v234
    %v250 = vpack.c.b16 %v237, %v236
    %v251 = vpack.c.b16 %v239, %v238
    %v252 = vpack.c.b16 %v241, %v240
    %v253 = vpack.c.b16 %v243, %v242
    %v254 = vpack.c.b16 %v245, %v244
    %v255 = vpack.c.b16 %v247, %v246
    %264 = vmatpush.bf16.msra.mxu0 %v255
    %265 = vmatpush.bf16.msra.mxu0 %v254
    %266 = vmatpush.bf16.msra.mxu0 %v253
    %267 = vmatpush.bf16.msra.mxu0 %v252
    %268 = vmatpush.bf16.msra.mxu0 %v251
    %269 = vmatpush.bf16.msra.mxu0 %v250
    %270 = vmatpush.bf16.msra.mxu0 %v249
    %271 = vmatpush.bf16.msra.mxu0 %v248
    %272 = vmatmul.bf16.gmra.mxu0 %v184
    %v273 = vpop.f32.mrf.mxu0
    %v274 = vadd.f32 %v118, %v273
    %v275 = vpop.f32.mrf.mxu0
    %v276 = vadd.f32 %v118, %v275
    %277 = vmatmul.bf16.gmra.mxu0 %v185
    %v278 = vpop.f32.mrf.mxu0
    %v279 = vadd.f32 %v118, %v278
    %v280 = vpop.f32.mrf.mxu0
    %v281 = vadd.f32 %v118, %v280
    %282 = vmatmul.bf16.gmra.mxu0 %v186
    %v283 = vpop.f32.mrf.mxu0
    %v284 = vadd.f32 %v118, %v283
    %v285 = vpop.f32.mrf.mxu0
    %v286 = vadd.f32 %v118, %v285
    %287 = vmatmul.bf16.gmra.mxu0 %v187
    %v288 = vpop.f32.mrf.mxu0
    %v289 = vadd.f32 %v118, %v288
    %v290 = vpop.f32.mrf.mxu0
    %v291 = vadd.f32 %v118, %v290
    %292 = vmatmul.bf16.gmra.mxu0 %v188
    %v293 = vpop.f32.mrf.mxu0
    %v294 = vadd.f32 %v118, %v293
    %v295 = vpop.f32.mrf.mxu0
    %v296 = vadd.f32 %v118, %v295
    %297 = vmatmul.bf16.gmra.mxu0 %v189
    %v298 = vpop.f32.mrf.mxu0
    %v299 = vadd.f32 %v118, %v298
    %v300 = vpop.f32.mrf.mxu0
    %v301 = vadd.f32 %v118, %v300
    %302 = vmatmul.bf16.gmra.mxu0 %v190
    %v303 = vpop.f32.mrf.mxu0
    %v304 = vadd.f32 %v118, %v303
    %v305 = vpop.f32.mrf.mxu0
    %v306 = vadd.f32 %v118, %v305
    %307 = vmatmul.bf16.gmra.mxu0 %v191
    %v308 = vpop.f32.mrf.mxu0
    %v309 = vadd.f32 %v118, %v308
    %v310 = vpop.f32.mrf.mxu0
    %v311 = vadd.f32 %v118, %v310
    %312 = vmatmul.bf16.gmra.mxu0 %v192
    %v313 = vpop.f32.mrf.mxu0
    %v314 = vadd.f32 %v118, %v313
    %v315 = vpop.f32.mrf.mxu0
    %v316 = vadd.f32 %v118, %v315
    %317 = vmatmul.bf16.gmra.mxu0 %v193
    %v318 = vpop.f32.mrf.mxu0
    %v319 = vadd.f32 %v118, %v318
    %v320 = vpop.f32.mrf.mxu0
    %v321 = vadd.f32 %v118, %v320
    %322 = vmatmul.bf16.gmra.mxu0 %v194
    %v323 = vpop.f32.mrf.mxu0
    %v324 = vadd.f32 %v118, %v323
    %v325 = vpop.f32.mrf.mxu0
    %v326 = vadd.f32 %v118, %v325
    %327 = vmatmul.bf16.gmra.mxu0 %v195
    %v328 = vpop.f32.mrf.mxu0
    %v329 = vadd.f32 %v118, %v328
    %v330 = vpop.f32.mrf.mxu0
    %v331 = vadd.f32 %v118, %v330
    %332 = vmatmul.bf16.gmra.mxu0 %v196
    %v333 = vpop.f32.mrf.mxu0
    %v334 = vadd.f32 %v118, %v333
    %v335 = vpop.f32.mrf.mxu0
    %v336 = vadd.f32 %v118, %v335
    %337 = vmatmul.bf16.gmra.mxu0 %v197
    %v338 = vpop.f32.mrf.mxu0
    %v339 = vadd.f32 %v118, %v338
    %v340 = vpop.f32.mrf.mxu0
    %v341 = vadd.f32 %v118, %v340
    %342 = vmatmul.bf16.gmra.mxu0 %v198
    %v343 = vpop.f32.mrf.mxu0
    %v344 = vadd.f32 %v118, %v343
    %v345 = vpop.f32.mrf.mxu0
    %v346 = vadd.f32 %v118, %v345
    %347 = vmatmul.bf16.gmra.mxu0 %v199
    %v348 = vpop.f32.mrf.mxu0
    %v349 = vadd.f32 %v118, %v348
    %v350 = vpop.f32.mrf.mxu0
    %v351 = vadd.f32 %v118, %v350
    %352 = vdwg.mxu0
    %v353 = vmax.f32 %v274, 0.0
    %v354 = vmax.f32 %v276, 0.0
    %v355 = vmax.f32 %v279, 0.0
    %v356 = vmax.f32 %v281, 0.0
    %v357 = vmax.f32 %v284, 0.0
    %v358 = vmax.f32 %v286, 0.0
    %v359 = vmax.f32 %v289, 0.0
    %v360 = vmax.f32 %v291, 0.0
    %v361 = vmax.f32 %v294, 0.0
    %v362 = vmax.f32 %v296, 0.0
    %v363 = vmax.f32 %v299, 0.0
    %v364 = vmax.f32 %v301, 0.0
    %v365 = vmax.f32 %v304, 0.0
    %v366 = vmax.f32 %v306, 0.0
    %v367 = vmax.f32 %v309, 0.0
    %v368 = vmax.f32 %v311, 0.0
    %v369 = vmax.f32 %v314, 0.0
    %v370 = vmax.f32 %v316, 0.0
    %v371 = vmax.f32 %v319, 0.0
    %v372 = vmax.f32 %v321, 0.0
    %v373 = vmax.f32 %v324, 0.0
    %v374 = vmax.f32 %v326, 0.0
    %v375 = vmax.f32 %v329, 0.0
    %v376 = vmax.f32 %v331, 0.0
    %v377 = vmax.f32 %v334, 0.0
    %v378 = vmax.f32 %v336, 0.0
    %v379 = vmax.f32 %v339, 0.0
    %v380 = vmax.f32 %v341, 0.0
    %v381 = vmax.f32 %v344, 0.0
    %v382 = vmax.f32 %v346, 0.0
    %v383 = vmax.f32 %v349, 0.0
    %v384 = vmax.f32 %v351, 0.0
    %v385 = vpack.c.bf16 %v354, %v353
    %v386 = vpack.c.bf16 %v356, %v355
    %v387 = vpack.c.bf16 %v358, %v357
    %v388 = vpack.c.bf16 %v360, %v359
    %v389 = vpack.c.bf16 %v362, %v361
    %v390 = vpack.c.bf16 %v364, %v363
    %v391 = vpack.c.bf16 %v366, %v365
    %v392 = vpack.c.bf16 %v368, %v367
    %v393 = vpack.c.bf16 %v370, %v369
    %v394 = vpack.c.bf16 %v372, %v371
    %v395 = vpack.c.bf16 %v374, %v373
    %v396 = vpack.c.bf16 %v376, %v375
    %v397 = vpack.c.bf16 %v378, %v377
    %v398 = vpack.c.bf16 %v380, %v379
    %v399 = vpack.c.bf16 %v382, %v381
    %v400 = vpack.c.bf16 %v384, %v383
    %v401 = vld [vmem:[#allocation7] sm:$0xf]
    %v402 = vld [vmem:[#allocation7 + $0x4] sm:$0xf]
    %v403 = vld [vmem:[#allocation7 + $0x8] sm:$0xf]
    %v404 = vld [vmem:[#allocation7 + $0xc] sm:$0xf]
    %v405 = vld [vmem:[#allocation7 + $0x10] sm:$0xf]
    %v406 = vld [vmem:[#allocation7 + $0x14] sm:$0xf]
    %v407 = vld [vmem:[#allocation7 + $0x18] sm:$0xf]
    %v408 = vld [vmem:[#allocation7 + $0x1c] sm:$0xf]
    %v409 = vld [vmem:[#allocation7 + $0x20] sm:$0xf]
    %v410 = vld [vmem:[#allocation7 + $0x24] sm:$0xf]
    %v411 = vld [vmem:[#allocation7 + $0x28] sm:$0xf]
    %v412 = vld [vmem:[#allocation7 + $0x2c] sm:$0xf]
    %v413 = vld [vmem:[#allocation7 + $0x30] sm:$0xf]
    %v414 = vld [vmem:[#allocation7 + $0x34] sm:$0xf]
    %v415 = vld [vmem:[#allocation7 + $0x38] sm:$0xf]
    %v416 = vld [vmem:[#allocation7 + $0x3c] sm:$0xf]
    %v417 = vld [vmem:[%s4] sm:$0x1]
    %v419 = vperm.slane %v417, 0
    %v437 = vunpack.c.l.b16 %v401
    %v438 = vunpack.c.l.b16 %v402
    %v439 = vunpack.c.l.b16 %v403
    %v440 = vunpack.c.l.b16 %v404
    %v441 = vunpack.c.l.b16 %v405
    %v442 = vunpack.c.l.b16 %v406
    %v443 = vunpack.c.l.b16 %v407
    %v444 = vunpack.c.l.b16 %v408
    %v445 = vunpack.c.l.b16 %v409
    %v446 = vunpack.c.l.b16 %v410
    %v447 = vunpack.c.l.b16 %v411
    %v448 = vunpack.c.l.b16 %v412
    %v449 = vunpack.c.l.b16 %v413
    %v450 = vunpack.c.l.b16 %v414
    %v451 = vunpack.c.l.b16 %v415
    %v452 = vunpack.c.l.b16 %v416
    %v453 = vpack.c.b16 %v438, %v437
    %v454 = vpack.c.b16 %v440, %v439
    %v455 = vpack.c.b16 %v442, %v441
    %v456 = vpack.c.b16 %v444, %v443
    %v457 = vpack.c.b16 %v446, %v445
    %v458 = vpack.c.b16 %v448, %v447
    %v459 = vpack.c.b16 %v450, %v449
    %v460 = vpack.c.b16 %v452, %v451
    %469 = vmatpush.bf16.msra.mxu0 %v460
    %470 = vmatpush.bf16.msra.mxu0 %v459
    %471 = vmatpush.bf16.msra.mxu0 %v458
    %472 = vmatpush.bf16.msra.mxu0 %v457
    %473 = vmatpush.bf16.msra.mxu0 %v456
    %474 = vmatpush.bf16.msra.mxu0 %v455
    %475 = vmatpush.bf16.msra.mxu0 %v454
    %476 = vmatpush.bf16.msra.mxu0 %v453
    %477 = vmatmul.bf16.gmra.mxu0 %v385
    %v478 = vpop.f32.mrf.mxu0
    %v479 = vadd.f32 %v419, %v478
    %v480 = vpop.f32.mrf.mxu0
    %v481 = vadd.f32 %v419, %v480
    %482 = vmatmul.bf16.gmra.mxu0 %v386
    %v483 = vpop.f32.mrf.mxu0
    %v484 = vadd.f32 %v419, %v483
    %v485 = vpop.f32.mrf.mxu0
    %v486 = vadd.f32 %v419, %v485
    %487 = vmatmul.bf16.gmra.mxu0 %v387
    %v488 = vpop.f32.mrf.mxu0
    %v489 = vadd.f32 %v419, %v488
    %v490 = vpop.f32.mrf.mxu0
    %v491 = vadd.f32 %v419, %v490
    %492 = vmatmul.bf16.gmra.mxu0 %v388
    %v493 = vpop.f32.mrf.mxu0
    %v494 = vadd.f32 %v419, %v493
    %v495 = vpop.f32.mrf.mxu0
    %v496 = vadd.f32 %v419, %v495
    %497 = vmatmul.bf16.gmra.mxu0 %v389
    %v498 = vpop.f32.mrf.mxu0
    %v499 = vadd.f32 %v419, %v498
    %v500 = vpop.f32.mrf.mxu0
    %v501 = vadd.f32 %v419, %v500
    %502 = vmatmul.bf16.gmra.mxu0 %v390
    %v503 = vpop.f32.mrf.mxu0
    %v504 = vadd.f32 %v419, %v503
    %v505 = vpop.f32.mrf.mxu0
    %v506 = vadd.f32 %v419, %v505
    %507 = vmatmul.bf16.gmra.mxu0 %v391
    %v508 = vpop.f32.mrf.mxu0
    %v509 = vadd.f32 %v419, %v508
    %v510 = vpop.f32.mrf.mxu0
    %v511 = vadd.f32 %v419, %v510
    %512 = vmatmul.bf16.gmra.mxu0 %v392
    %v513 = vpop.f32.mrf.mxu0
    %v514 = vadd.f32 %v419, %v513
    %v515 = vpop.f32.mrf.mxu0
    %v516 = vadd.f32 %v419, %v515
    %517 = vmatmul.bf16.gmra.mxu0 %v393
    %v518 = vpop.f32.mrf.mxu0
    %v519 = vadd.f32 %v419, %v518
    %v520 = vpop.f32.mrf.mxu0
    %v521 = vadd.f32 %v419, %v520
    %522 = vmatmul.bf16.gmra.mxu0 %v394
    %v523 = vpop.f32.mrf.mxu0
    %v524 = vadd.f32 %v419, %v523
    %v525 = vpop.f32.mrf.mxu0
    %v526 = vadd.f32 %v419, %v525
    %527 = vmatmul.bf16.gmra.mxu0 %v395
    %v528 = vpop.f32.mrf.mxu0
    %v529 = vadd.f32 %v419, %v528
    %v530 = vpop.f32.mrf.mxu0
    %v531 = vadd.f32 %v419, %v530
    %532 = vmatmul.bf16.gmra.mxu0 %v396
    %v533 = vpop.f32.mrf.mxu0
    %v534 = vadd.f32 %v419, %v533
    %v535 = vpop.f32.mrf.mxu0
    %v536 = vadd.f32 %v419, %v535
    %537 = vmatmul.bf16.gmra.mxu0 %v397
    %v538 = vpop.f32.mrf.mxu0
    %v539 = vadd.f32 %v419, %v538
    %v540 = vpop.f32.mrf.mxu0
    %v541 = vadd.f32 %v419, %v540
    %542 = vmatmul.bf16.gmra.mxu0 %v398
    %v543 = vpop.f32.mrf.mxu0
    %v544 = vadd.f32 %v419, %v543
    %v545 = vpop.f32.mrf.mxu0
    %v546 = vadd.f32 %v419, %v545
    %547 = vmatmul.bf16.gmra.mxu0 %v399
    %v548 = vpop.f32.mrf.mxu0
    %v549 = vadd.f32 %v419, %v548
    %v550 = vpop.f32.mrf.mxu0
    %v551 = vadd.f32 %v419, %v550
    %552 = vmatmul.bf16.gmra.mxu0 %v400
    %v553 = vpop.f32.mrf.mxu0
    %v554 = vadd.f32 %v419, %v553
    %v555 = vpop.f32.mrf.mxu0
    %v556 = vadd.f32 %v419, %v555
    %557 = vdwg.mxu0
    %v558 = vmul.f32 %v479, %v479
    %v559 = vmul.f32 %v481, %v481
    %v560 = vmul.f32 %v484, %v484
    %v561 = vmul.f32 %v486, %v486
    %v562 = vmul.f32 %v489, %v489
    %v563 = vmul.f32 %v491, %v491
    %v564 = vmul.f32 %v494, %v494
    %v565 = vmul.f32 %v496, %v496
    %v566 = vmul.f32 %v499, %v499
    %v567 = vmul.f32 %v501, %v501
    %v568 = vmul.f32 %v504, %v504
    %v569 = vmul.f32 %v506, %v506
    %v570 = vmul.f32 %v509, %v509
    %v571 = vmul.f32 %v511, %v511
    %v572 = vmul.f32 %v514, %v514
    %v573 = vmul.f32 %v516, %v516
    %v574 = vmul.f32 %v519, %v519
    %v575 = vmul.f32 %v521, %v521
    %v576 = vmul.f32 %v524, %v524
    %v577 = vmul.f32 %v526, %v526
    %v578 = vmul.f32 %v529, %v529
    %v579 = vmul.f32 %v531, %v531
    %v580 = vmul.f32 %v534, %v534
    %v581 = vmul.f32 %v536, %v536
    %v582 = vmul.f32 %v539, %v539
    %v583 = vmul.f32 %v541, %v541
    %v584 = vmul.f32 %v544, %v544
    %v585 = vmul.f32 %v546, %v546
    %v586 = vmul.f32 %v549, %v549
    %v587 = vmul.f32 %v551, %v551
    %v588 = vmul.f32 %v554, %v554
    %v589 = vmul.f32 %v556, %v556
    %590 = vxpose.xlu0.b32.start [1/16] %v558, 128
    %591 = vxpose.xlu0.b32.cont [2/16] %v559, 128
    %592 = vxpose.xlu0.b32.cont [3/16] %v560, 128
    %593 = vxpose.xlu0.b32.cont [4/16] %v561, 128
    %594 = vxpose.xlu0.b32.cont [5/16] %v562, 128
    %595 = vxpose.xlu0.b32.cont [6/16] %v563, 128
    %596 = vxpose.xlu0.b32.cont [7/16] %v564, 128
    %597 = vxpose.xlu0.b32.cont [8/16] %v565, 128
    %598 = vxpose.xlu0.b32.cont [9/16] %v566, 128
    %599 = vxpose.xlu0.b32.cont [10/16] %v567, 128
    %600 = vxpose.xlu0.b32.cont [11/16] %v568, 128
    %601 = vxpose.xlu0.b32.cont [12/16] %v569, 128
    %602 = vxpose.xlu0.b32.cont [13/16] %v570, 128
    %603 = vxpose.xlu0.b32.cont [14/16] %v571, 128
    %604 = vxpose.xlu0.b32.cont [15/16] %v572, 128
    %605 = vxpose.xlu0.b32.end [16/16] %v573, 128
    %v606 = vpop.trf.xlu0
    %v607 = vpop.trf.xlu0
    %v608 = vpop.trf.xlu0
    %v609 = vpop.trf.xlu0
    %v610 = vpop.trf.xlu0
    %v611 = vpop.trf.xlu0
    %v612 = vpop.trf.xlu0
    %v613 = vpop.trf.xlu0
    %v614 = vpop.trf.xlu0
    %v615 = vpop.trf.xlu0
    %v616 = vpop.trf.xlu0
    %v617 = vpop.trf.xlu0
    %v618 = vpop.trf.xlu0
    %v619 = vpop.trf.xlu0
    %v620 = vpop.trf.xlu0
    %v621 = vpop.trf.xlu0
    %622 = vxpose.xlu0.b32.start [1/16] %v574, 128
    %623 = vxpose.xlu0.b32.cont [2/16] %v575, 128
    %624 = vxpose.xlu0.b32.cont [3/16] %v576, 128
    %625 = vxpose.xlu0.b32.cont [4/16] %v577, 128
    %626 = vxpose.xlu0.b32.cont [5/16] %v578, 128
    %627 = vxpose.xlu0.b32.cont [6/16] %v579, 128
    %628 = vxpose.xlu0.b32.cont [7/16] %v580, 128
    %629 = vxpose.xlu0.b32.cont [8/16] %v581, 128
    %630 = vxpose.xlu0.b32.cont [9/16] %v582, 128
    %631 = vxpose.xlu0.b32.cont [10/16] %v583, 128
    %632 = vxpose.xlu0.b32.cont [11/16] %v584, 128
    %633 = vxpose.xlu0.b32.cont [12/16] %v585, 128
    %634 = vxpose.xlu0.b32.cont [13/16] %v586, 128
    %635 = vxpose.xlu0.b32.cont [14/16] %v587, 128
    %636 = vxpose.xlu0.b32.cont [15/16] %v588, 128
    %637 = vxpose.xlu0.b32.end [16/16] %v589, 128
    %v638 = vpop.trf.xlu0
    %v639 = vpop.trf.xlu0
    %v640 = vpop.trf.xlu0
    %v641 = vpop.trf.xlu0
    %v642 = vpop.trf.xlu0
    %v643 = vpop.trf.xlu0
    %v644 = vpop.trf.xlu0
    %v645 = vpop.trf.xlu0
    %v646 = vpop.trf.xlu0
    %v647 = vpop.trf.xlu0
    %v648 = vpop.trf.xlu0
    %v649 = vpop.trf.xlu0
    %v650 = vpop.trf.xlu0
    %v651 = vpop.trf.xlu0
    %v652 = vpop.trf.xlu0
    %v653 = vpop.trf.xlu0
    %v654 = vadd.f32 %v606, %v607
    %v655 = vadd.f32 %v654, %v608
    %v656 = vadd.f32 %v655, %v609
    %v657 = vadd.f32 %v656, %v610
    %v658 = vadd.f32 %v657, %v611
    %v659 = vadd.f32 %v658, %v612
    %v660 = vadd.f32 %v659, %v613
    %v661 = vadd.f32 %v660, %v614
    %v662 = vadd.f32 %v661, %v615
    %v663 = vadd.f32 %v662, %v616
    %v664 = vadd.f32 %v663, %v617
    %v665 = vadd.f32 %v664, %v618
    %v666 = vadd.f32 %v665, %v619
    %v667 = vadd.f32 %v666, %v620
    %v668 = vadd.f32 %v667, %v621
    %v669 = vrot.slane %v668, 4
    %v670 = vadd.f32 %v668, %v669
    %v671 = vrot.slane %v670, 2
    %v672 = vadd.f32 %v670, %v671
    %v673 = vrot.slane %v672, 1
    %v674 = vadd.f32 %v672, %v673
    %v675 = vadd.f32 %v638, %v639
    %v676 = vadd.f32 %v675, %v640
    %v677 = vadd.f32 %v676, %v641
    %v678 = vadd.f32 %v677, %v642
    %v679 = vadd.f32 %v678, %v643
    %v680 = vadd.f32 %v679, %v644
    %v681 = vadd.f32 %v680, %v645
    %v682 = vadd.f32 %v681, %v646
    %v683 = vadd.f32 %v682, %v647
    %v684 = vadd.f32 %v683, %v648
    %v685 = vadd.f32 %v684, %v649
    %v686 = vadd.f32 %v685, %v650
    %v687 = vadd.f32 %v686, %v651
    %v688 = vadd.f32 %v687, %v652
    %v689 = vadd.f32 %v688, %v653
    %v690 = vrot.slane %v689, 4
    %v691 = vadd.f32 %v689, %v690
    %v692 = vrot.slane %v691, 2
    %v693 = vadd.f32 %v691, %v692
    %v694 = vrot.slane %v693, 1
    %v695 = vadd.f32 %v693, %v694
    %v696 = vmul.f32 %v674, 0.03125
    %v697 = vmul.f32 %v695, 0.03125
    %v700 = vrot.slane %v697, 7
    %vm701 = vcmask 1040384
    %v702 = vsel %vm701, %v696, %v700
    %v704 = vlaneseq
    %vm705 = vcmp.ge.s32.totalorder %v704, 0
    %vm706 = vcmp.lt.s32.totalorder %v704, 256
    %vm707 = vmand %vm705, %vm706
    %708 = vst.msk [vmem:[#allocation8] sm:$0x3] %vm707, %v702
    // Predicated region
    $region34: #{tpu_custom_call.1} parent=1 // pred_check
      _
    $region35: #{tpu_custom_call.1} parent=1 // pred_check_branch
      %710 = sbr.rel (0) target = $region37
    $region36: #{tpu_custom_call.1} parent=1 // pred_region
      %712 = vsyncadd [#allocation4], 0
      %s714 = sshll.u32 [#allocation8], 4
      %s715 = int_to_ptr.vmem [resolvable:$true] %s714
      %s716 = sshll.u32 %s5, 4
      %s717 = int_to_ptr.hbm [resolvable:$true] %s716
      %719 = dma.vmem_to_hbm [thread:$0]  %s715, 32, %s717, [#allocation4]
    $region37: #{tpu_custom_call.1} parent=1 // pred_fallthru
      _
    // Predicated region
    $region38: #{tpu_custom_call.1} parent=1 // pred_check
      _
    $region39: #{tpu_custom_call.1} parent=1 // pred_check_branch
      %721 = sbr.rel (0) target = $region41
    $region40: #{tpu_custom_call.1} parent=1 // pred_region
      %723 = dma.done [#allocation4], 32
    $region41: #{tpu_custom_call.1} parent=1 // pred_fallthru
      _
    %724 = vsyncpa [#allocation3], 1
    %725 = vsyncpa [#allocation6], 1
    %726 = vsyncpa [#allocation4], 1

</llo_original>
